<compile_context>
chip_gen: v5e
topology: v5e:2x2
jax: 0.10.0
libtpu: 0.0.40
codegen_flags: <defaults>
</compile_context>

<pallas_src>
import math
import functools

import jax
import jax.numpy as jnp
from jax import lax
from jax.experimental import pallas as pl
from jax.experimental.pallas import tpu as pltpu


_GOLDEN = 0x9E3779B9  # 2654435769


def _pe_dropout_kernel(seed_ref, x_ref, pe_ref, o_ref, *,
                       p, training, tile_s, tile_b, batch, d_model):
    # seed_ref: (1,) int32 in SMEM (scalar prefetch)
    # x_ref   : (tS, tB, D) VMEM
    # pe_ref  : (tS, 1,  D) VMEM — broadcast over batch inside the kernel.
    x = x_ref[...]
    pe = pe_ref[...].astype(x.dtype)
    y = x + pe

    if training and p >= 1.0:
        # torch.nn.Dropout(p=1.0) zeroes everything.
        out = jnp.zeros(o_ref.shape, o_ref.dtype)
    elif training and p > 0.0:
        i = pl.program_id(0)
        j = pl.program_id(1)

        # Block-constant offset + seed mix folded into ONE scalar (scalar ALU),
        # so the per-element counter work is just 2 int muls + 3 int adds.
        stride_r = (batch * d_model) & 0x7FFFFFFF
        seed = seed_ref[0].astype(jnp.uint32)
        base = ((i * tile_s * stride_r + j * tile_b * d_model).astype(jnp.uint32)
                + seed * jnp.uint32(_GOLDEN))

        # Global element coordinates -> tiling-invariant counter.
        shape = y.shape
        r = lax.broadcasted_iota(jnp.int32, shape, 0)
        b = lax.broadcasted_iota(jnp.int32, shape, 1)
        d = lax.broadcasted_iota(jnp.int32, shape, 2)
        ctr = (r * stride_r + b * d_model + d).astype(jnp.uint32) + base

        # One-multiply xor-shift mixer: dropout does not need full murmur
        # quality, and this keeps the per-element VALU cost well under the HBM
        # roofline on v7x.
        h = ctr ^ (ctr >> 16)
        h = h * jnp.uint32(0x7FEB352D)
        h = h ^ (h >> 15)

        # Keep with probability (1 - p): drop iff the top 31 bits < p * 2^31.
        bits31 = (h >> 1).astype(jnp.int32)
        thr = jnp.int32(min(int(round(p * (1 << 31))), (1 << 31) - 1))
        keep = bits31 >= thr

        # Scale in f32 and cast once at the store (torch scales before any
        # downcast) — removes the bf16 1/(1-p) rounding bias, free VPU work.
        scale = jnp.float32(1.0 / (1.0 - p))
        y32 = y.astype(jnp.float32) * scale
        out = jnp.where(keep, y32, jnp.float32(0.0)).astype(o_ref.dtype)
        # TODO(synk): for bf16 inputs, derive two keep decisions per 32-bit hash
        # (compare high/low 16-bit halves against a 16-bit threshold) to halve
        # the per-element hash work on v7x.
    else:
        out = y.astype(o_ref.dtype)

    o_ref[...] = out


def _vmem_budget():
    """Generation-aware VMEM limit: ~48 MiB on v7x (64 MiB/TC), ~96 MiB on
    v5e/v6e (128 MiB)."""
    cap = 64 * 1024 * 1024  # conservative default = v7x per-TC VMEM
    try:
        info = pltpu.get_tpu_info()
        reported = int(getattr(info, "vmem_capacity_bytes", 0) or 0)
        if reported > 0:
            cap = reported
    except Exception:
        pass
    limit = min((cap * 3) // 4, cap - 16 * 1024 * 1024)
    limit = max(limit, 16 * 1024 * 1024)
    limit = min(limit, cap)
    return cap, limit


def _choose_tiles(S, B, D, itemsize, target_bytes):
    """Pick (tS, tB) so each x/out block is ~target_bytes and (8,128)-legal.

    Last two block dims are either the full (B, D) extents or tB is a multiple
    of the dtype sublane packing (8 f32 / 16 bf16 / 32 int8), so stores stay
    unmasked and sublane-dense.  D always stays full (lane-dense whenever
    d_model % 128 == 0).
    """
    pack = max(8, 32 // max(1, int(itemsize)))   # sublane packing per vreg
    row_bytes = B * D * itemsize                 # one seq position, full batch
    if B <= pack or row_bytes <= target_bytes:
        tB = B
    else:
        tB = pack
        while tB * 2 <= B and tB * 2 * D * itemsize <= target_bytes:
            tB *= 2
    tile_row_bytes = max(1, tB * D * itemsize)
    tS = int(max(1, min(S, target_bytes // tile_row_bytes)))
    return tS, int(tB)


def make_pe_table(d_model, max_len=5000, dtype=jnp.float32):
    """Deterministic positional-encoding buffer, shape (max_len, 1, d_model)."""
    position = jnp.arange(max_len, dtype=jnp.float32)[:, None]           # (L, 1)
    div_term = jnp.exp(
        jnp.arange(0, d_model, 2, dtype=jnp.float32) * (-math.log(10000.0) / d_model)
    )                                                                    # (D/2,)
    ang = position * div_term                                            # (L, D/2)
    # interleave: pe[:, 0::2] = sin, pe[:, 1::2] = cos
    pe = jnp.stack([jnp.sin(ang), jnp.cos(ang)], axis=-1).reshape(max_len, d_model)
    return pe[:, None, :].astype(dtype)                                  # (L, 1, D)


def positional_encoding(x, pe, seed, *, p=0.1, training=True, donate_x=False):
    """x: (S, B, D); pe: (max_len, 1, D) full table; seed: python int."""
    S, B, D = x.shape
    assert pe.shape[0] >= S and pe.shape[1] == 1 and pe.shape[2] == D
    seed_arr = jnp.asarray([seed], dtype=jnp.int32)

    itemsize = jnp.dtype(x.dtype).itemsize
    _, vmem_limit = _vmem_budget()
    hash_active = bool(training) and (0.0 < float(p) < 1.0)
    # Leave room for the hash's block-sized integer temporaries when active.
    target_bytes = max(2 * 1024 * 1024, vmem_limit // (10 if hash_active else 6))

    tS, tB = _choose_tiles(S, B, D, itemsize, target_bytes)
    grid = (pl.cdiv(S, tS), pl.cdiv(B, tB))      # batch axis innermost

    kernel = functools.partial(
        _pe_dropout_kernel, p=float(p), training=bool(training),
        tile_s=tS, tile_b=tB, batch=B, d_model=D)

    return pl.pallas_call(
        kernel,
        out_shape=jax.ShapeDtypeStruct((S, B, D), x.dtype),
        grid_spec=pltpu.PrefetchScalarGridSpec(
            num_scalar_prefetch=1,                # seed -> SMEM
            grid=grid,
            in_specs=[
                # x tile
                pl.BlockSpec((tS, tB, D), lambda i, j, *_: (i, j, 0)),
                # pe tile: depends only on the S axis, so it is NOT re-fetched
                # across the inner batch axis; cast happens in-kernel.
                pl.BlockSpec((tS, 1, D), lambda i, j, *_: (i, 0, 0)),
            ],
            out_specs=pl.BlockSpec((tS, tB, D), lambda i, j, *_: (i, j, 0)),
        ),
        compiler_params=pltpu.CompilerParams(
            # TODO(synk): if an xprof trace on v7x shows one TensorCore idle,
            # mark the S axis pltpu.CORE_PARALLEL to shard across the 2 TCs.
            dimension_semantics=("parallel", "parallel"),
            vmem_limit_bytes=int(vmem_limit),
        ),
        # Reuse x's HBM buffer for the output when the caller can donate x.
        input_output_aliases=({1: 0} if donate_x else {}),
    )(seed_arr, x, pe)


if __name__ == "__main__":
    key = jax.random.PRNGKey(0)
    S, B, D = 8, 2, 32          # seq_len, batch, d_model
    MAX_LEN = 64
    P = 0.1

    x = jax.random.normal(key, (S, B, D), dtype=jnp.float32)
    pe = make_pe_table(D, max_len=MAX_LEN)
    ref = x + pe[:S]

    # Eval mode: dropout is identity -> exact match with the reference add.
    y_eval = jax.block_until_ready(
        positional_encoding(x, pe, seed=0, p=P, training=False))
    assert y_eval.shape == (S, B, D)
    assert jnp.allclose(y_eval, ref, atol=1e-6), "eval-mode mismatch"

    # Training mode: every element must be either dropped (exactly 0) or the
    # reference value scaled by 1/(1-p).  (The mask differs from torch's RNG
    # stream, but the Bernoulli/scale semantics match.)
    y_train = jax.block_until_ready(
        positional_encoding(x, pe, seed=1234, p=P, training=True))
    assert y_train.shape == (S, B, D)
    assert bool(jnp.all(jnp.isfinite(y_train)))
    scaled = ref / (1.0 - P)
    ok = jnp.isclose(y_train, scaled, atol=1e-5) | (y_train == 0.0)
    assert bool(jnp.all(ok)), "training-mode dropout semantics mismatch"

    print("KERNEL_OK")
</pallas_src>

<mosaic_0001>
module attributes {stable_mosaic.version = 11 : i64} {
  func.func @_pe_dropout_kernel(%arg0: i32, %arg1: i32, %arg2: memref<1xi32, #tpu.memory_space<smem>>, %arg3: memref<8x2x32xf32, #tpu.memory_space<vmem>>, %arg4: memref<8x1x32xf32, #tpu.memory_space<vmem>>, %arg5: memref<8x2x32xf32, #tpu.memory_space<vmem>>) attributes {dimension_semantics = [#tpu.dimension_semantics<parallel>, #tpu.dimension_semantics<parallel>], iteration_bounds = array<i64: 1, 1>, scalar_prefetch = 1 : i64, scratch_operands = 0 : i64, tpu.core_type = #tpu.core_type<tc>, window_params = [{transform_indices = @transform_0, window_bounds = array<i64: 8, 2, 32>}, {transform_indices = @transform_1, window_bounds = array<i64: 8, 1, 32>}, {transform_indices = @transform_2, window_bounds = array<i64: 8, 2, 32>}]} {
    %c0 = arith.constant 0 : index
    %c0_0 = arith.constant 0 : index
    %c0_1 = arith.constant 0 : index
    %0 = vector.load %arg3[%c0, %c0_0, %c0_1] : memref<8x2x32xf32, #tpu.memory_space<vmem>>, vector<8x2x32xf32>
    %c0_2 = arith.constant 0 : index
    %c0_3 = arith.constant 0 : index
    %c0_4 = arith.constant 0 : index
    %1 = vector.load %arg4[%c0_2, %c0_3, %c0_4] : memref<8x1x32xf32, #tpu.memory_space<vmem>>, vector<8x1x32xf32>
    %2 = vector.broadcast %1 : vector<8x1x32xf32> to vector<8x2x32xf32>
    %3 = arith.addf %0, %2 : vector<8x2x32xf32>
    %c0_5 = arith.constant 0 : index
    %c0_6 = arith.constant 0 : index
    %c0_7 = arith.constant 0 : index
    %4 = vector.load %arg5[%c0_5, %c0_6, %c0_7] : memref<8x2x32xf32, #tpu.memory_space<vmem>>, vector<8x2x32xf32>
    tpu.vector_store %arg5[%c0_5, %c0_6, %c0_7], %3 {strides = array<i32>} : memref<8x2x32xf32, #tpu.memory_space<vmem>>, vector<8x2x32xf32>,
    return
  }
  func.func @transform_0(%arg0: i32, %arg1: i32, %arg2: memref<1xi32, #tpu.memory_space<smem>>) -> (i32, i32, i32) {
    %c0_i32 = arith.constant 0 : i32
    %c0_i32_0 = arith.constant 0 : i32
    return %arg0, %arg1, %c0_i32 : i32, i32, i32
  }
  func.func @transform_1(%arg0: i32, %arg1: i32, %arg2: memref<1xi32, #tpu.memory_space<smem>>) -> (i32, i32, i32) {
    %c0_i32 = arith.constant 0 : i32
    %c0_i32_0 = arith.constant 0 : i32
    %c0_i32_1 = arith.constant 0 : i32
    return %arg0, %c0_i32, %c0_i32_0 : i32, i32, i32
  }
  func.func @transform_2(%arg0: i32, %arg1: i32, %arg2: memref<1xi32, #tpu.memory_space<smem>>) -> (i32, i32, i32) {
    %c0_i32 = arith.constant 0 : i32
    %c0_i32_0 = arith.constant 0 : i32
    return %arg0, %arg1, %c0_i32 : i32, i32, i32
  }
}

</mosaic_0001>

<llo_original>
// kernel: tpu_custom_call.1
$region0: #{tpu_custom_call.1}
  #allocation0 [shape = 'u32[]', space=smem, size = 0x4, offset = 0x4, fixed_abs, tag = 'smem constant byte address 0x4 - core index']
  #allocation1 [shape = 'u32[72,128]{1,0:T(1,128)}', space=vmem, size = 0x9000, scoped, tag = 'internal scratch']
  #allocation2 [shape = 's32[1]{0}', space=sflag, size = 0x4, scoped, tag = 'scoped memory for tpu_custom_call.1']
  #allocation3 [shape = 's32[1]{0:T(128)S(6)}', space=smem, size = 0x200, scoped, tag = 'prefetched SMEM operand 0']
  %s0 = inlined_call_operand.<no memory space> [shape: s32[1], index: 0, kind: input, shape index: {}]
  %s1 = inlined_call_operand.vmem [shape: f32[8,2,32], index: 1, kind: input, shape index: {}]
  %s2 = inlined_call_operand.vmem [shape: f32[64,1,32], index: 2, kind: input, shape index: {}]
  %s3 = inlined_call_operand.hbm [shape: f32[8,2,32], index: 3, kind: output, shape index: {}]
  %s4 = sld [smem:[#allocation0]]
  $region18: #{tpu_custom_call.1} parent=0
    _
  %s6 = ssub.s32 1, %s4
  %s7 = scalar_select 0, %s6, %s4
  %8 = sst [smem:[#allocation3]] %s0
  $region1: #{tpu_custom_call.1} parent=0
    #allocation4 [shape = 'u8[8192]{0}', space=vmem, size = 0x2000, scoped, tag = 'output window, operand 0, single buffered']
    #allocation5 [shape = 's32[1]{0}', space=sflag, size = 0x4, scoped, tag = 'scoped memory for tpu_custom_call.1']
    %9 = vsyncpa [#allocation5], 0
    // Predicated region
    $region2: #{tpu_custom_call.1} parent=1 // pred_check
      _
    $region3: #{tpu_custom_call.1} parent=1 // pred_check_branch
      %11 = sbr.rel (0) target = $region5
    $region4: #{tpu_custom_call.1} parent=1 // pred_region
      _
    $region5: #{tpu_custom_call.1} parent=1 // pred_fallthru
      _
    // Predicated region
    $region6: #{tpu_custom_call.1} parent=1 // pred_check
      _
    $region7: #{tpu_custom_call.1} parent=1 // pred_check_branch
      %13 = sbr.rel (0) target = $region9
    $region8: #{tpu_custom_call.1} parent=1 // pred_region
      _
    $region9: #{tpu_custom_call.1} parent=1 // pred_fallthru
      _
    %v14 = vld [vmem:[%s1] sm:$0x3]
    %v15 = vld [vmem:[%s1 + $0x2] sm:$0x3]
    %v16 = vld [vmem:[%s1 + $0x4] sm:$0x3]
    %v17 = vld [vmem:[%s1 + $0x6] sm:$0x3]
    %v18 = vld [vmem:[%s1 + $0x8] sm:$0x3]
    %v19 = vld [vmem:[%s1 + $0xa] sm:$0x3]
    %v20 = vld [vmem:[%s1 + $0xc] sm:$0x3]
    %v21 = vld [vmem:[%s1 + $0xe] sm:$0x3]
    %v22 = vld [vmem:[%s2] sm:$0x1]
    %v23 = vld [vmem:[%s2 + $0x1] sm:$0x1]
    %v24 = vld [vmem:[%s2 + $0x2] sm:$0x1]
    %v25 = vld [vmem:[%s2 + $0x3] sm:$0x1]
    %v26 = vld [vmem:[%s2 + $0x4] sm:$0x1]
    %v27 = vld [vmem:[%s2 + $0x5] sm:$0x1]
    %v28 = vld [vmem:[%s2 + $0x6] sm:$0x1]
    %v29 = vld [vmem:[%s2 + $0x7] sm:$0x1]
    %v38 = vperm.slane %v22, 0
    %v39 = vperm.slane %v23, 0
    %v40 = vperm.slane %v24, 0
    %v41 = vperm.slane %v25, 0
    %v42 = vperm.slane %v26, 0
    %v43 = vperm.slane %v27, 0
    %v44 = vperm.slane %v28, 0
    %v45 = vperm.slane %v29, 0
    %v54 = vadd.f32 %v14, %v38
    %v55 = vadd.f32 %v15, %v39
    %v56 = vadd.f32 %v16, %v40
    %v57 = vadd.f32 %v17, %v41
    %v58 = vadd.f32 %v18, %v42
    %v59 = vadd.f32 %v19, %v43
    %v60 = vadd.f32 %v20, %v44
    %v61 = vadd.f32 %v21, %v45
    %vm62 = vcmask 254976
    %63 = vst.msk [vmem:[#allocation4] sm:$0x3] %vm62, %v54
    %64 = vst.msk [vmem:[#allocation4 + $0x2] sm:$0x3] %vm62, %v55
    %65 = vst.msk [vmem:[#allocation4 + $0x4] sm:$0x3] %vm62, %v56
    %66 = vst.msk [vmem:[#allocation4 + $0x6] sm:$0x3] %vm62, %v57
    %67 = vst.msk [vmem:[#allocation4 + $0x8] sm:$0x3] %vm62, %v58
    %68 = vst.msk [vmem:[#allocation4 + $0xa] sm:$0x3] %vm62, %v59
    %69 = vst.msk [vmem:[#allocation4 + $0xc] sm:$0x3] %vm62, %v60
    %70 = vst.msk [vmem:[#allocation4 + $0xe] sm:$0x3] %vm62, %v61
    // Predicated region
    $region10: #{tpu_custom_call.1} parent=1 // pred_check
      _
    $region11: #{tpu_custom_call.1} parent=1 // pred_check_branch
      %72 = sbr.rel (0) target = $region13
    $region12: #{tpu_custom_call.1} parent=1 // pred_region
      %74 = vsyncadd [#allocation5], 0
      %s75 = sshll.u32 [#allocation4], 4
      %s76 = int_to_ptr.vmem [resolvable:$true] %s75
      %s77 = sshll.u32 %s3, 4
      %s78 = int_to_ptr.hbm [resolvable:$true] %s77
      %83 = dma.vmem_to_hbm [thread:$0]  %s76, 256, %s78, [#allocation5], 32, 32, 2
    $region13: #{tpu_custom_call.1} parent=1 // pred_fallthru
      _
    // Predicated region
    $region14: #{tpu_custom_call.1} parent=1 // pred_check
      _
    $region15: #{tpu_custom_call.1} parent=1 // pred_check_branch
      %85 = sbr.rel (0) target = $region17
    $region16: #{tpu_custom_call.1} parent=1 // pred_region
      %87 = dma.done [#allocation5], 256
    $region17: #{tpu_custom_call.1} parent=1 // pred_fallthru
      _
    %88 = vsyncpa [#allocation5], 1

</llo_original>
